<compile_context>
chip_gen: v6e
topology: v6e:2x2x1
jax: 0.10.0
libtpu: 0.0.40
codegen_flags: <defaults>
</compile_context>

<pallas_src>
import jax
import jax.numpy as jnp
from jax import lax
from jax.experimental import pallas as pl
from jax.experimental.pallas import tpu as pltpu

_LANE = 128
_SUBLANE = 8


def _cdiv(a, b):
    return -(-a // b)


def _vmem_budgets():
    """(block_budget_bytes, vmem_limit_bytes), generation-aware with a safe fallback."""
    phys = 64 * 1024 * 1024                       # conservative default = v7x physical VMEM
    try:
        info = pltpu.get_tpu_info()
        cap = int(getattr(info, "vmem_capacity_bytes", 0) or 0)
        if cap > 0:
            phys = cap
    except Exception:
        pass
    block_budget = phys // 2                      # v7x: 32 MiB, v5e/v6e: 64 MiB for blocks
    vmem_limit = (phys * 3) // 4                  # v7x: 48 MiB, v5e/v6e: 96 MiB scoped limit
    return block_budget, vmem_limit


def _pick_tiles(B, C, S, itemsize, block_budget):
    """Choose (batch_tiled, Bt, s_tile, chunk_s).

    Footprints are exact: blocks are (Bt, C, S_TILE, 128) with S_TILE a multiple of 8
    (or the full S when S < 8), so there is no hidden sublane padding.
    """
    chunk_s = min(S, _SUBLANE)                    # in-kernel compute granularity (<= 8 rows)
    lane_row = C * _LANE * itemsize               # one batch, one S-row, all channels

    # Does the whole batch fit in one block at the minimum spatial tile?
    # (in + out) x double-buffer = 4x the block bytes.
    if 4 * B * lane_row * chunk_s <= block_budget:
        tiled, Bt = False, B
    else:
        tiled = True
        per_b = 4 * lane_row * chunk_s            # per-batch-row cost (in+out, dbl-buffered)
        x0_b = 2 * lane_row * chunk_s             # always-resident batch-0 block (dbl-buffered)
        Bt = max(1, min(B - 1, (block_budget - x0_b) // per_b))

    per_s_io = 2 * Bt * lane_row                  # HBM bytes (in + out) per unit of S
    per_s_vmem = 2 * per_s_io + (2 * lane_row if tiled else 0)
    cap = max(chunk_s, (block_budget // per_s_vmem) // chunk_s * chunk_s)

    if S <= chunk_s:
        s_tile = S                                # tiny input: one (full) block
    else:
        target_step_bytes = 2 * 1024 * 1024       # amortize ~0.35us/step overhead
        if S * per_s_io >= 4 * target_step_bytes:
            want = _cdiv(target_step_bytes, per_s_io)   # big problem: ~2 MiB per step
        else:
            want = _cdiv(S, 4)                          # small problem: aim for ~4 steps
        s_tile = _cdiv(want, chunk_s) * chunk_s
        s_tile = max(chunk_s, min(s_tile, cap, (S // chunk_s) * chunk_s))
        # Prefer an even number of grid steps (v7x megacore balance).
        n = _cdiv(S, s_tile)
        if n > 1 and n % 2 == 1:
            for cand in (s_tile + chunk_s, s_tile - chunk_s, s_tile + 2 * chunk_s):
                if chunk_s <= cand <= cap and _cdiv(S, cand) % 2 == 0:
                    s_tile = cand
                    break
    return tiled, Bt, s_tile, chunk_s


def _denominator(x0):
    """x0: (1, C, cs, 128) f32 batch-0 slab -> (e0, inv) with inv = 1 / sum_c exp(x0 - max_c)."""
    m0 = jnp.max(x0, axis=1, keepdims=True)
    e0 = jnp.exp(x0 - m0)
    inv = 1.0 / jnp.sum(e0, axis=1, keepdims=True)          # (1, 1, cs, 128), exact reciprocal
    return e0, inv


def _make_whole_batch_kernel(B, s_tile, chunk_s):
    """Grid over spatial tiles only; the whole batch is resident in the block."""
    n_chunks = s_tile // chunk_s

    def kernel(x_ref, o_ref):
        # x_ref / o_ref: (B, C, s_tile, 128)
        def process(sl):
            x0 = x_ref[pl.ds(0, 1), :, sl, :].astype(jnp.float32)
            e0, inv = _denominator(x0)
            o_ref[pl.ds(0, 1), :, sl, :] = (e0 * inv).astype(o_ref.dtype)

            def per_batch(b, carry):
                xb = x_ref[pl.ds(b, 1), :, sl, :].astype(jnp.float32)
                mb = jnp.max(xb, axis=1, keepdims=True)
                eb = jnp.exp(xb - mb)
                o_ref[pl.ds(b, 1), :, sl, :] = (eb * inv).astype(o_ref.dtype)
                return carry

            lax.fori_loop(1, B, per_batch, 0, unroll=(B <= 4))

        if n_chunks == 1:
            process(pl.ds(0, s_tile))
        else:
            def per_chunk(j, c):
                off = pl.multiple_of(j * chunk_s, chunk_s)
                process(pl.ds(off, chunk_s))
                return c
            lax.fori_loop(0, n_chunks, per_chunk, 0, unroll=(n_chunks <= 4))

    return kernel


def _make_batch_tiled_kernel(Bt, s_tile, chunk_s):
    """Grid over (batch blocks, spatial tiles); batch 0 is a separate always-resident input."""
    n_chunks = s_tile // chunk_s

    def kernel(x0_ref, x_ref, o_ref):
        # x0_ref: (1, C, s_tile, 128); x_ref / o_ref: (Bt, C, s_tile, 128)
        def process(sl):
            x0 = x0_ref[:, :, sl, :].astype(jnp.float32)
            _, inv = _denominator(x0)

            def per_batch(b, carry):
                xb = x_ref[pl.ds(b, 1), :, sl, :].astype(jnp.float32)
                mb = jnp.max(xb, axis=1, keepdims=True)
                eb = jnp.exp(xb - mb)
                o_ref[pl.ds(b, 1), :, sl, :] = (eb * inv).astype(o_ref.dtype)
                return carry

            lax.fori_loop(0, Bt, per_batch, 0, unroll=(Bt <= 4))

        if n_chunks == 1:
            process(pl.ds(0, s_tile))
        else:
            def per_chunk(j, c):
                off = pl.multiple_of(j * chunk_s, chunk_s)
                process(pl.ds(off, chunk_s))
                return c
            lax.fori_loop(0, n_chunks, per_chunk, 0, unroll=(n_chunks <= 4))

    return kernel


def softmax_layer(x):
    """x: (B, C, H, W) -> (B, C, H, W), faithful to the PyTorch module (batch-0 denominator)."""
    if x.ndim != 4:
        raise ValueError("softmax_layer expects a (B, C, H, W) input")
    B, C, H, W = x.shape
    hw = H * W
    itemsize = jnp.dtype(x.dtype).itemsize

    # Fold spatial into full 128-lane rows; pad if needed (padded columns are discarded).
    S = _cdiv(hw, _LANE)
    hw_pad = S * _LANE
    x3 = x.reshape(B, C, hw)
    if hw_pad != hw:
        x3 = jnp.pad(x3, ((0, 0), (0, 0), (0, hw_pad - hw)))
    x4 = x3.reshape(B, C, S, _LANE)

    block_budget, vmem_limit = _vmem_budgets()
    tiled, Bt, s_tile, chunk_s = _pick_tiles(B, C, S, itemsize, block_budget)
    n_s = _cdiv(S, s_tile)

    if not tiled:
        kernel = _make_whole_batch_kernel(B, s_tile, chunk_s)
        grid = (n_s,)
        in_specs = [pl.BlockSpec((B, C, s_tile, _LANE), lambda i: (0, 0, i, 0))]
        out_specs = pl.BlockSpec((B, C, s_tile, _LANE), lambda i: (0, 0, i, 0))
        dim_sem = ("parallel",)
        operands = (x4,)
        extra_read = 0
    else:
        n_b = _cdiv(B, Bt)
        kernel = _make_batch_tiled_kernel(Bt, s_tile, chunk_s)
        grid = (n_b, n_s)
        in_specs = [
            pl.BlockSpec((1, C, s_tile, _LANE), lambda b, i: (0, 0, i, 0)),    # batch-0 block
            pl.BlockSpec((Bt, C, s_tile, _LANE), lambda b, i: (b, 0, i, 0)),
        ]
        out_specs = pl.BlockSpec((Bt, C, s_tile, _LANE), lambda b, i: (b, 0, i, 0))
        dim_sem = ("parallel", "parallel")
        operands = (x4, x4)
        extra_read = n_b * C * hw_pad * itemsize

    out4 = pl.pallas_call(
        kernel,
        out_shape=jax.ShapeDtypeStruct((B, C, S, _LANE), x.dtype),
        grid=grid,
        in_specs=in_specs,
        out_specs=out_specs,
        compiler_params=pltpu.CompilerParams(
            dimension_semantics=dim_sem,
            vmem_limit_bytes=int(vmem_limit),
        ),
        cost_estimate=pl.CostEstimate(
            flops=4 * B * C * hw_pad,
            transcendentals=B * C * hw_pad,
            bytes_accessed=2 * B * C * hw_pad * itemsize + extra_read,
        ),
    )(*operands)

    out = out4.reshape(B, C, hw_pad)
    if hw_pad != hw:
        out = out[:, :, :hw]
    return out.reshape(B, C, H, W)


if __name__ == "__main__":
    key = jax.random.PRNGKey(0)
    x = jax.random.normal(key, (2, 4, 16, 16), dtype=jnp.float32)

    out = softmax_layer(x)
    jax.block_until_ready(out)

    # Pure-JAX reference mirroring the PyTorch code (including the `[0]` batch-0 quirk).
    m = jnp.max(x, axis=1, keepdims=True)
    e = jnp.exp(x - m)
    summ = jnp.sum(e, axis=1, keepdims=True)[0]          # (1, H, W): batch-0 channel sum
    ref = e / summ

    assert out.shape == x.shape and out.dtype == x.dtype
    assert jnp.allclose(out, ref, atol=1e-6, rtol=1e-6), "mismatch vs reference"
    print("KERNEL_OK")
</pallas_src>

<mosaic_0001>
module attributes {stable_mosaic.version = 11 : i64} {
  func.func @kernel(%arg0: i32, %arg1: memref<2x4x2x128xf32, #tpu.memory_space<vmem>>, %arg2: memref<2x4x2x128xf32, #tpu.memory_space<vmem>>) attributes {dimension_semantics = [#tpu.dimension_semantics<parallel>], iteration_bounds = array<i64: 1>, scalar_prefetch = 0 : i64, scratch_operands = 0 : i64, tpu.core_type = #tpu.core_type<tc>, window_params = [{transform_indices = @transform_0, window_bounds = array<i64: 2, 4, 2, 128>}, {transform_indices = @transform_1, window_bounds = array<i64: 2, 4, 2, 128>}]} {
    %c0 = arith.constant 0 : index
    %c0_0 = arith.constant 0 : index
    %c0_1 = arith.constant 0 : index
    %c0_2 = arith.constant 0 : index
    %0 = vector.load %arg1[%c0, %c0_0, %c0_1, %c0_2] : memref<2x4x2x128xf32, #tpu.memory_space<vmem>>, vector<1x4x2x128xf32>
    %cst = arith.constant dense<0xFF800000> : vector<1x2x128xf32>
    %1 = vector.multi_reduction <maximumf>, %0, %cst [1] : vector<1x4x2x128xf32> to vector<1x2x128xf32>
    %2 = vector.shape_cast %1 : vector<1x2x128xf32> to vector<1x1x2x128xf32>
    %3 = vector.broadcast %2 : vector<1x1x2x128xf32> to vector<1x4x2x128xf32>
    %4 = arith.subf %0, %3 : vector<1x4x2x128xf32>
    %5 = math.exp %4 : vector<1x4x2x128xf32>
    %cst_3 = arith.constant dense<0.000000e+00> : vector<1x2x128xf32>
    %6 = vector.multi_reduction <add>, %5, %cst_3 [1] : vector<1x4x2x128xf32> to vector<1x2x128xf32>
    %7 = vector.shape_cast %6 : vector<1x2x128xf32> to vector<1x1x2x128xf32>
    %cst_4 = arith.constant 1.000000e+00 : f32
    %8 = vector.broadcast %cst_4 : f32 to vector<1x1x2x128xf32>
    %9 = arith.divf %8, %7 : vector<1x1x2x128xf32>
    %10 = vector.broadcast %9 : vector<1x1x2x128xf32> to vector<1x4x2x128xf32>
    %11 = arith.mulf %5, %10 : vector<1x4x2x128xf32>
    %c0_5 = arith.constant 0 : index
    %c0_6 = arith.constant 0 : index
    %c0_7 = arith.constant 0 : index
    %c0_8 = arith.constant 0 : index
    %12 = vector.load %arg2[%c0_5, %c0_6, %c0_7, %c0_8] : memref<2x4x2x128xf32, #tpu.memory_space<vmem>>, vector<1x4x2x128xf32>
    tpu.vector_store %arg2[%c0_5, %c0_6, %c0_7, %c0_8], %11 {strides = array<i32>} : memref<2x4x2x128xf32, #tpu.memory_space<vmem>>, vector<1x4x2x128xf32>,
    %c1_i32 = arith.constant 1 : i32
    %13 = arith.index_cast %c1_i32 : i32 to index
    %c0_9 = arith.constant 0 : index
    %c0_10 = arith.constant 0 : index
    %c0_11 = arith.constant 0 : index
    %14 = vector.load %arg1[%13, %c0_9, %c0_10, %c0_11] : memref<2x4x2x128xf32, #tpu.memory_space<vmem>>, vector<1x4x2x128xf32>
    %cst_12 = arith.constant dense<0xFF800000> : vector<1x2x128xf32>
    %15 = vector.multi_reduction <maximumf>, %14, %cst_12 [1] : vector<1x4x2x128xf32> to vector<1x2x128xf32>
    %16 = vector.shape_cast %15 : vector<1x2x128xf32> to vector<1x1x2x128xf32>
    %17 = vector.broadcast %16 : vector<1x1x2x128xf32> to vector<1x4x2x128xf32>
    %18 = arith.subf %14, %17 : vector<1x4x2x128xf32>
    %19 = math.exp %18 : vector<1x4x2x128xf32>
    %20 = vector.broadcast %9 : vector<1x1x2x128xf32> to vector<1x4x2x128xf32>
    %21 = arith.mulf %19, %20 : vector<1x4x2x128xf32>
    %22 = arith.index_cast %c1_i32 : i32 to index
    %c0_13 = arith.constant 0 : index
    %c0_14 = arith.constant 0 : index
    %c0_15 = arith.constant 0 : index
    %23 = vector.load %arg2[%22, %c0_13, %c0_14, %c0_15] : memref<2x4x2x128xf32, #tpu.memory_space<vmem>>, vector<1x4x2x128xf32>
    tpu.vector_store %arg2[%22, %c0_13, %c0_14, %c0_15], %21 {strides = array<i32>} : memref<2x4x2x128xf32, #tpu.memory_space<vmem>>, vector<1x4x2x128xf32>,
    %c1_i32_16 = arith.constant 1 : i32
    return
  }
  func.func @transform_0(%arg0: i32) -> (i32, i32, i32, i32) {
    %c0_i32 = arith.constant 0 : i32
    %c0_i32_0 = arith.constant 0 : i32
    %c0_i32_1 = arith.constant 0 : i32
    %c0_i32_2 = arith.constant 0 : i32
    return %c0_i32, %c0_i32_0, %arg0, %c0_i32_1 : i32, i32, i32, i32
  }
  func.func @transform_1(%arg0: i32) -> (i32, i32, i32, i32) {
    %c0_i32 = arith.constant 0 : i32
    %c0_i32_0 = arith.constant 0 : i32
    %c0_i32_1 = arith.constant 0 : i32
    %c0_i32_2 = arith.constant 0 : i32
    return %c0_i32, %c0_i32_0, %arg0, %c0_i32_1 : i32, i32, i32, i32
  }
}

</mosaic_0001>

<llo_original>
// kernel: tpu_custom_call.1
$region0: #{tpu_custom_call.1}
  #allocation0 [shape = 'u32[]', space=smem, size = 0x4, offset = 0x4, fixed_abs, tag = 'smem constant byte address 0x4 - core index']
  #allocation1 [shape = 'u32[144,128]{1,0:T(1,128)}', space=vmem, size = 0x12000, scoped, tag = 'internal scratch']
  %s0 = inlined_call_operand.hbm [shape: f32[2,4,2,128], index: 0, kind: input, shape index: {}]
  %s1 = inlined_call_operand.hbm [shape: f32[2,4,2,128], index: 1, kind: output, shape index: {}]
  %s2 = sld [smem:[#allocation0]]
  $region18: #{tpu_custom_call.1} parent=0
    _
  %s4 = ssub.s32 1, %s2
  %s5 = scalar_select 0, %s4, %s2
  $region1: #{tpu_custom_call.1} parent=0
    #allocation2 [shape = 'u8[8192]{0}', space=vmem, size = 0x2000, scoped, tag = 'input window, operand 0, single buffered']
    #allocation3 [shape = 's32[1]{0}', space=sflag, size = 0x4, scoped, tag = 'scoped memory for tpu_custom_call.1']
    #allocation4 [shape = 's32[1]{0}', space=sflag, size = 0x4, scoped, tag = 'scoped memory for tpu_custom_call.1']
    #allocation5 [shape = 'u8[8192]{0}', space=vmem, size = 0x2000, scoped, tag = 'output window, operand 0, single buffered']
    %6 = vsyncpa [#allocation3], 0
    %7 = vsyncpa [#allocation4], 0
    // Predicated region
    $region2: #{tpu_custom_call.1} parent=1 // pred_check
      _
    $region3: #{tpu_custom_call.1} parent=1 // pred_check_branch
      %9 = sbr.rel (0) target = $region5
    $region4: #{tpu_custom_call.1} parent=1 // pred_region
      %s11 = ssub.s32 256, 256
      %12 = vsyncadd [#allocation3], %s11
      %s13 = sshll.u32 [#allocation2], 4
      %s14 = int_to_ptr.vmem [resolvable:$true] %s13
      %19 = dma.hbm_to_vmem [thread:$0]  %s0, 256, %s14, [#allocation3], 32, 32, 2
    $region5: #{tpu_custom_call.1} parent=1 // pred_fallthru
      _
    // Predicated region
    $region6: #{tpu_custom_call.1} parent=1 // pred_check
      _
    $region7: #{tpu_custom_call.1} parent=1 // pred_check_branch
      %21 = sbr.rel (0) target = $region9
    $region8: #{tpu_custom_call.1} parent=1 // pred_region
      %22 = dma.done [#allocation3], 256
    $region9: #{tpu_custom_call.1} parent=1 // pred_fallthru
      _
    %v23 = vld [vmem:[#allocation2] sm:$0x3]
    %v24 = vld [vmem:[#allocation2 + $0x2] sm:$0x3]
    %v25 = vld [vmem:[#allocation2 + $0x4] sm:$0x3]
    %v26 = vld [vmem:[#allocation2 + $0x6] sm:$0x3]
    %vm27 = vcmask 1041408
    %v28 = vsel %vm27, %v23, -inf
    %v29 = vsel %vm27, %v24, -inf
    %v30 = vsel %vm27, %v25, -inf
    %v31 = vsel %vm27, %v26, -inf
    %v32 = vmax.f32 %v28, %v29
    %v33 = vmax.f32 %v30, %v31
    %v34 = vmax.f32 %v32, %v33
    %v35 = vsub.f32 %v23, %v34
    %v36 = vsub.f32 %v24, %v34
    %v37 = vsub.f32 %v25, %v34
    %v38 = vsub.f32 %v26, %v34
    %v39 = vmul.f32 %v35, 1.442695
    %v40 = vpow.pop %v39
    %v41 = vmul.f32 %v36, 1.442695
    %v42 = vpow.pop %v41
    %v43 = vmul.f32 %v37, 1.442695
    %v44 = vpow.pop %v43
    %v45 = vmul.f32 %v38, 1.442695
    %v46 = vpow.pop %v45
    %v47 = vsel %vm27, %v40, 0.0
    %v48 = vsel %vm27, %v42, 0.0
    %v49 = vadd.f32 %v47, %v48
    %v50 = vsel %vm27, %v44, 0.0
    %v51 = vadd.f32 %v49, %v50
    %v52 = vsel %vm27, %v46, 0.0
    %v53 = vadd.f32 %v51, %v52
    %v54 = vrcp.pop %v53
    %v55 = vmul.f32 1.0, %v54
    %v56 = vmul.f32 %v40, %v55
    %v57 = vmul.f32 %v42, %v55
    %v58 = vmul.f32 %v44, %v55
    %v59 = vmul.f32 %v46, %v55
    %60 = vst [vmem:[#allocation5] sm:$0x3] %v56
    %61 = vst [vmem:[#allocation5 + $0x2] sm:$0x3] %v57
    %62 = vst [vmem:[#allocation5 + $0x4] sm:$0x3] %v58
    %63 = vst [vmem:[#allocation5 + $0x6] sm:$0x3] %v59
    %s64 = scalar_lea.vmem [#allocation2], 8
    %v65 = vld [vmem:[%s64] sm:$0x3]
    %v66 = vld [vmem:[%s64 + $0x2] sm:$0x3]
    %v67 = vld [vmem:[%s64 + $0x4] sm:$0x3]
    %v68 = vld [vmem:[%s64 + $0x6] sm:$0x3]
    %v69 = vsel %vm27, %v65, -inf
    %v70 = vsel %vm27, %v66, -inf
    %v71 = vsel %vm27, %v67, -inf
    %v72 = vsel %vm27, %v68, -inf
    %v73 = vmax.f32 %v69, %v70
    %v74 = vmax.f32 %v71, %v72
    %v75 = vmax.f32 %v73, %v74
    %v76 = vsub.f32 %v65, %v75
    %v77 = vsub.f32 %v66, %v75
    %v78 = vsub.f32 %v67, %v75
    %v79 = vsub.f32 %v68, %v75
    %v80 = vmul.f32 %v76, 1.442695
    %v81 = vpow.pop %v80
    %v82 = vmul.f32 %v77, 1.442695
    %v83 = vpow.pop %v82
    %v84 = vmul.f32 %v78, 1.442695
    %v85 = vpow.pop %v84
    %v86 = vmul.f32 %v79, 1.442695
    %v87 = vpow.pop %v86
    %v88 = vmul.f32 %v81, %v55
    %v89 = vmul.f32 %v83, %v55
    %v90 = vmul.f32 %v85, %v55
    %v91 = vmul.f32 %v87, %v55
    %s92 = scalar_lea.vmem [#allocation5], 8
    %93 = vst [vmem:[%s92] sm:$0x3] %v88
    %94 = vst [vmem:[%s92 + $0x2] sm:$0x3] %v89
    %95 = vst [vmem:[%s92 + $0x4] sm:$0x3] %v90
    %96 = vst [vmem:[%s92 + $0x6] sm:$0x3] %v91
    // Predicated region
    $region10: #{tpu_custom_call.1} parent=1 // pred_check
      _
    $region11: #{tpu_custom_call.1} parent=1 // pred_check_branch
      %98 = sbr.rel (0) target = $region13
    $region12: #{tpu_custom_call.1} parent=1 // pred_region
      %s100 = ssub.s32 256, 256
      %101 = vsyncadd [#allocation4], %s100
      %s102 = sshll.u32 [#allocation5], 4
      %s103 = int_to_ptr.vmem [resolvable:$true] %s102
      %108 = dma.vmem_to_hbm [thread:$0]  %s103, 256, %s1, [#allocation4], 32, 32, 2
    $region13: #{tpu_custom_call.1} parent=1 // pred_fallthru
      _
    // Predicated region
    $region14: #{tpu_custom_call.1} parent=1 // pred_check
      _
    $region15: #{tpu_custom_call.1} parent=1 // pred_check_branch
      %110 = sbr.rel (0) target = $region17
    $region16: #{tpu_custom_call.1} parent=1 // pred_region
      %111 = dma.done [#allocation4], 256
    $region17: #{tpu_custom_call.1} parent=1 // pred_fallthru
      _
    %112 = vsyncpa [#allocation3], 1
    %113 = vsyncpa [#allocation4], 1

</llo_original>
